<compile_context>
chip_gen: v6e
topology: v6e:2x2x1
jax: 0.10.0
libtpu: 0.0.40
codegen_flags: <defaults>
</compile_context>

<pallas_src>
import functools

import jax
import jax.numpy as jnp
from jax.experimental import pallas as pl
from jax.experimental.pallas import tpu as pltpu


def _round_up(x: int, m: int) -> int:
    return (x + m - 1) // m * m


def _semantic_integration_kernel(scal_ref,        # SMEM (3,)  : c0, c1, c2
                                 sim_ref,         # VMEM (TN,F): emb['sim'] tile
                                 cor_ref,         # VMEM (TN,F): emb['cor'] tile
                                 w_c2s_ref,       # VMEM (F,F) : cor2sim.weight.T   (resident)
                                 w_s2c_ref,       # VMEM (F,F) : sim2cor.weight.T   (resident)
                                 w_comb_sim_ref,  # VMEM (F,F) : Ws2c^T @ Wc2s^T    (resident)
                                 w_comb_cor_ref,  # VMEM (F,F) : Wc2s^T @ Ws2c^T    (resident)
                                 zsim_ref,        # VMEM (TN,F): output z2sim tile
                                 zcor_ref):       # VMEM (TN,F): output z2cor tile
    c0 = scal_ref[0]
    c1 = scal_ref[1]
    c2 = scal_ref[2]

    sim = sim_ref[...]
    cor = cor_ref[...]

    # Four independent MXU matmuls, all on the raw input tiles (no serial
    # dependency between first and second hop), f32 accumulation.
    cor_c2s = jnp.dot(cor, w_c2s_ref[...], preferred_element_type=jnp.float32)
    sim_s2c = jnp.dot(sim, w_s2c_ref[...], preferred_element_type=jnp.float32)
    sim_cmb = jnp.dot(sim, w_comb_sim_ref[...], preferred_element_type=jnp.float32)
    cor_cmb = jnp.dot(cor, w_comb_cor_ref[...], preferred_element_type=jnp.float32)

    # z2sim = (1-a2-b2)*sim + (a2 + b2*(1-a1))*cor@Wc2s^T + (b2*a1)*sim@(Ws2c^T@Wc2s^T)
    # z2cor = (1-a2-b2)*cor + (a2 + b2*(1-a1))*sim@Ws2c^T + (b2*a1)*cor@(Wc2s^T@Ws2c^T)
    z2sim = c0 * sim.astype(jnp.float32) + c1 * cor_c2s + c2 * sim_cmb
    z2cor = c0 * cor.astype(jnp.float32) + c1 * sim_s2c + c2 * cor_cmb

    zsim_ref[...] = z2sim.astype(zsim_ref.dtype)
    zcor_ref[...] = z2cor.astype(zcor_ref.dtype)


def semantic_integration(sim, cor, w_sim2cor, w_cor2sim, a1, a2, b2, *,
                         tile_n: int = 256,
                         compute_dtype=None,
                         vmem_limit_bytes: int | None = None):
    """Pallas implementation of SemanticIntegration.forward.

    Args:
      sim, cor:      [N, F] node embeddings.
      w_sim2cor:     [F, F] torch-layout Linear weight (y = x @ W^T), no bias.
      w_cor2sim:     [F, F] torch-layout Linear weight, no bias.
      a1, a2, b2:    scalar parameters.
      tile_n:        row-tile size (multiple of 8). ~512 is a good default on
                     v5e/v6e, ~256 on v7x (64 MiB VMEM). Pick it so the grid
                     has >= 2 steps on v7x to use both TensorCores.
      compute_dtype: optional MXU dtype (e.g. jnp.bfloat16 on v6e/v7x);
                     accumulation stays f32, output keeps the input dtype.

    Returns: dict with 'sim' -> z2sim [N, F], 'cor' -> z2cor [N, F].
    """
    N, F = sim.shape
    assert cor.shape == (N, F)
    assert w_sim2cor.shape == (F, F) and w_cor2sim.shape == (F, F), (
        "SemanticIntegration adds Linear outputs to the raw embeddings, so "
        "in_feats must equal out_feats (square weights expected).")

    out_dtype = sim.dtype
    cdt = jnp.dtype(compute_dtype) if compute_dtype is not None else jnp.dtype(sim.dtype)

    # Scalar coefficients of the algebraically-flattened two-hop mix.
    a1 = jnp.asarray(a1, jnp.float32).reshape(())
    a2 = jnp.asarray(a2, jnp.float32).reshape(())
    b2 = jnp.asarray(b2, jnp.float32).reshape(())
    c0 = 1.0 - a2 - b2
    c1 = a2 + b2 * (1.0 - a1)
    c2 = b2 * a1
    scal = jnp.stack([c0, c1, c2])

    # Weight prep (tiny F x F work, done once in XLA outside the kernel).
    w_c2s_t_f32 = w_cor2sim.T.astype(jnp.float32)   # [F_in, F_out]
    w_s2c_t_f32 = w_sim2cor.T.astype(jnp.float32)
    w_comb_sim = (w_s2c_t_f32 @ w_c2s_t_f32)        # sim @ Ws2c^T @ Wc2s^T
    w_comb_cor = (w_c2s_t_f32 @ w_s2c_t_f32)        # cor @ Wc2s^T @ Ws2c^T

    w_c2s_t = w_c2s_t_f32.astype(cdt)
    w_s2c_t = w_s2c_t_f32.astype(cdt)
    w_comb_sim = w_comb_sim.astype(cdt)
    w_comb_cor = w_comb_cor.astype(cdt)

    sim_c = sim.astype(cdt)
    cor_c = cor.astype(cdt)

    # Row tiling: big tiles, ragged N handled by padding one extra (partial)
    # tile worth of rows rather than shrinking the tile everywhere.
    tile_n = _round_up(max(8, min(int(tile_n), _round_up(N, 8))), 8)
    n_pad = _round_up(N, tile_n)
    if n_pad != N:
        pad = ((0, n_pad - N), (0, 0))
        sim_c = jnp.pad(sim_c, pad)
        cor_c = jnp.pad(cor_c, pad)
    grid = (n_pad // tile_n,)

    # Explicit VMEM budget: resident weights (single copy) + double-buffered
    # activation/output tiles, plus slack.
    act_item = max(jnp.dtype(cdt).itemsize, jnp.dtype(out_dtype).itemsize)
    weights_bytes = 4 * F * F * jnp.dtype(cdt).itemsize
    act_bytes = 4 * 2 * tile_n * F * act_item          # (2 in + 2 out) x 2 buffers
    if vmem_limit_bytes is None:
        est = weights_bytes + act_bytes + (8 << 20)
        vmem_limit_bytes = int(min(max(est, 32 << 20), 100 << 20))

    # TODO(synk): for F that is small / not a multiple of 128, lane-pad F (or
    # fuse the two outputs into one [tile_n, 2F] slab) to avoid masked stores.

    row_spec = pl.BlockSpec((tile_n, F), lambda i: (i, 0))
    vmem_resident = pl.BlockSpec(memory_space=pltpu.MemorySpace.VMEM)

    z2sim, z2cor = pl.pallas_call(
        _semantic_integration_kernel,
        out_shape=(jax.ShapeDtypeStruct((n_pad, F), out_dtype),
                   jax.ShapeDtypeStruct((n_pad, F), out_dtype)),
        grid=grid,
        in_specs=[
            pl.BlockSpec(memory_space=pltpu.MemorySpace.SMEM),  # c0, c1, c2
            row_spec,                                           # sim tile
            row_spec,                                           # cor tile
            vmem_resident,                                      # W_cor2sim^T
            vmem_resident,                                      # W_sim2cor^T
            vmem_resident,                                      # Ws2c^T @ Wc2s^T
            vmem_resident,                                      # Wc2s^T @ Ws2c^T
        ],
        out_specs=(row_spec, row_spec),
        compiler_params=pltpu.CompilerParams(
            dimension_semantics=("parallel",),
            vmem_limit_bytes=vmem_limit_bytes),
    )(scal, sim_c, cor_c, w_c2s_t, w_s2c_t, w_comb_sim, w_comb_cor)

    if n_pad != N:
        z2sim = z2sim[:N]
        z2cor = z2cor[:N]
    return {'sim': z2sim, 'cor': z2cor}


def _reference(sim, cor, w_sim2cor, w_cor2sim, a1, a2, b2):
    """Plain-JAX reference mirroring the PyTorch forward exactly."""
    cor2sim = lambda x: x @ w_cor2sim.T
    sim2cor = lambda x: x @ w_sim2cor.T
    z1sim = (1 - a1) * sim + a1 * cor2sim(cor)
    z1cor = (1 - a1) * cor + a1 * sim2cor(sim)
    z2sim = (1 - a2 - b2) * sim + a2 * cor2sim(cor) + b2 * cor2sim(z1cor)
    z2cor = (1 - a2 - b2) * cor + a2 * sim2cor(sim) + b2 * sim2cor(z1sim)
    return {'sim': z2sim, 'cor': z2cor}


if __name__ == "__main__":
    key = jax.random.PRNGKey(0)
    N, F = 128, 128                      # num nodes, in_feats == out_feats
    k_sim, k_cor, k_w1, k_w2 = jax.random.split(key, 4)

    sim = jax.random.normal(k_sim, (N, F), dtype=jnp.float32)
    cor = jax.random.normal(k_cor, (N, F), dtype=jnp.float32)

    # Small nonzero constants for a1/a2/b2 (torch init is zeros) so the
    # matmul path is actually exercised.
    bound = 1.0 / (F ** 0.5)
    w_sim2cor = jax.random.uniform(k_w1, (F, F), jnp.float32, -bound, bound)
    w_cor2sim = jax.random.uniform(k_w2, (F, F), jnp.float32, -bound, bound)
    a1, a2, b2 = 0.3, 0.25, 0.2

    # tile_n=64 keeps the demo grid at 2 steps; for real workloads use the
    # default (256) or 512 on v5e/v6e.
    out = semantic_integration(sim, cor, w_sim2cor, w_cor2sim, a1, a2, b2,
                               tile_n=64)
    jax.block_until_ready(out)

    ref = _reference(sim, cor, w_sim2cor, w_cor2sim, a1, a2, b2)
    # Tolerance loosened slightly vs. 1e-5: the composite-weight refactor
    # reassociates the second-hop contraction.
    assert jnp.allclose(out['sim'], ref['sim'], atol=1e-4, rtol=1e-4)
    assert jnp.allclose(out['cor'], ref['cor'], atol=1e-4, rtol=1e-4)

    print("KERNEL_OK")
</pallas_src>

<mosaic_0001>
module attributes {stable_mosaic.version = 11 : i64} {
  func.func @_semantic_integration_kernel(%arg0: i32, %arg1: memref<3xf32, #tpu.memory_space<smem>>, %arg2: memref<64x128xf32, #tpu.memory_space<vmem>>, %arg3: memref<64x128xf32, #tpu.memory_space<vmem>>, %arg4: memref<128x128xf32, #tpu.memory_space<vmem>>, %arg5: memref<128x128xf32, #tpu.memory_space<vmem>>, %arg6: memref<128x128xf32, #tpu.memory_space<vmem>>, %arg7: memref<128x128xf32, #tpu.memory_space<vmem>>, %arg8: memref<64x128xf32, #tpu.memory_space<vmem>>, %arg9: memref<64x128xf32, #tpu.memory_space<vmem>>) attributes {dimension_semantics = [#tpu.dimension_semantics<parallel>], iteration_bounds = array<i64: 2>, scalar_prefetch = 0 : i64, scratch_operands = 0 : i64, tpu.core_type = #tpu.core_type<tc>, window_params = [{transform_indices = @transform_0, window_bounds = array<i64: 3>}, {transform_indices = @transform_1, window_bounds = array<i64: 64, 128>}, {transform_indices = @transform_2, window_bounds = array<i64: 64, 128>}, {pipeline_mode = #tpu.pipeline_mode<synchronous>, transform_indices = @transform_3, window_bounds = array<i64: 128, 128>}, {pipeline_mode = #tpu.pipeline_mode<synchronous>, transform_indices = @transform_4, window_bounds = array<i64: 128, 128>}, {pipeline_mode = #tpu.pipeline_mode<synchronous>, transform_indices = @transform_5, window_bounds = array<i64: 128, 128>}, {pipeline_mode = #tpu.pipeline_mode<synchronous>, transform_indices = @transform_6, window_bounds = array<i64: 128, 128>}, {transform_indices = @transform_7, window_bounds = array<i64: 64, 128>}, {transform_indices = @transform_8, window_bounds = array<i64: 64, 128>}]} {
    %c0 = arith.constant 0 : index
    %0 = memref.load %arg1[%c0] : memref<3xf32, #tpu.memory_space<smem>>
    %c1 = arith.constant 1 : index
    %1 = memref.load %arg1[%c1] : memref<3xf32, #tpu.memory_space<smem>>
    %c2 = arith.constant 2 : index
    %2 = memref.load %arg1[%c2] : memref<3xf32, #tpu.memory_space<smem>>
    %c0_0 = arith.constant 0 : index
    %c0_1 = arith.constant 0 : index
    %3 = vector.load %arg2[%c0_0, %c0_1] : memref<64x128xf32, #tpu.memory_space<vmem>>, vector<64x128xf32>
    %c0_2 = arith.constant 0 : index
    %c0_3 = arith.constant 0 : index
    %4 = vector.load %arg3[%c0_2, %c0_3] : memref<64x128xf32, #tpu.memory_space<vmem>>, vector<64x128xf32>
    %c0_4 = arith.constant 0 : index
    %c0_5 = arith.constant 0 : index
    %5 = vector.load %arg4[%c0_4, %c0_5] : memref<128x128xf32, #tpu.memory_space<vmem>>, vector<128x128xf32>
    %cst = arith.constant dense<0.000000e+00> : vector<64x128xf32>
    %6 = tpu.matmul %4, %5, %cst {dimension_numbers = #tpu.dot_dimension_numbers<[1], [0], [0], [1], [0, 0, 1, 1], [], []>} : vector<64x128xf32>, vector<128x128xf32>, vector<64x128xf32> -> vector<64x128xf32>
    %c0_6 = arith.constant 0 : index
    %c0_7 = arith.constant 0 : index
    %7 = vector.load %arg5[%c0_6, %c0_7] : memref<128x128xf32, #tpu.memory_space<vmem>>, vector<128x128xf32>
    %cst_8 = arith.constant dense<0.000000e+00> : vector<64x128xf32>
    %8 = tpu.matmul %3, %7, %cst_8 {dimension_numbers = #tpu.dot_dimension_numbers<[1], [0], [0], [1], [0, 0, 1, 1], [], []>} : vector<64x128xf32>, vector<128x128xf32>, vector<64x128xf32> -> vector<64x128xf32>
    %c0_9 = arith.constant 0 : index
    %c0_10 = arith.constant 0 : index
    %9 = vector.load %arg6[%c0_9, %c0_10] : memref<128x128xf32, #tpu.memory_space<vmem>>, vector<128x128xf32>
    %cst_11 = arith.constant dense<0.000000e+00> : vector<64x128xf32>
    %10 = tpu.matmul %3, %9, %cst_11 {dimension_numbers = #tpu.dot_dimension_numbers<[1], [0], [0], [1], [0, 0, 1, 1], [], []>} : vector<64x128xf32>, vector<128x128xf32>, vector<64x128xf32> -> vector<64x128xf32>
    %c0_12 = arith.constant 0 : index
    %c0_13 = arith.constant 0 : index
    %11 = vector.load %arg7[%c0_12, %c0_13] : memref<128x128xf32, #tpu.memory_space<vmem>>, vector<128x128xf32>
    %cst_14 = arith.constant dense<0.000000e+00> : vector<64x128xf32>
    %12 = tpu.matmul %4, %11, %cst_14 {dimension_numbers = #tpu.dot_dimension_numbers<[1], [0], [0], [1], [0, 0, 1, 1], [], []>} : vector<64x128xf32>, vector<128x128xf32>, vector<64x128xf32> -> vector<64x128xf32>
    %13 = vector.broadcast %0 : f32 to vector<64x128xf32>
    %14 = arith.mulf %13, %3 : vector<64x128xf32>
    %15 = vector.broadcast %1 : f32 to vector<64x128xf32>
    %16 = arith.mulf %15, %6 : vector<64x128xf32>
    %17 = arith.addf %14, %16 : vector<64x128xf32>
    %18 = vector.broadcast %2 : f32 to vector<64x128xf32>
    %19 = arith.mulf %18, %10 : vector<64x128xf32>
    %20 = arith.addf %17, %19 : vector<64x128xf32>
    %21 = vector.broadcast %0 : f32 to vector<64x128xf32>
    %22 = arith.mulf %21, %4 : vector<64x128xf32>
    %23 = vector.broadcast %1 : f32 to vector<64x128xf32>
    %24 = arith.mulf %23, %8 : vector<64x128xf32>
    %25 = arith.addf %22, %24 : vector<64x128xf32>
    %26 = vector.broadcast %2 : f32 to vector<64x128xf32>
    %27 = arith.mulf %26, %12 : vector<64x128xf32>
    %28 = arith.addf %25, %27 : vector<64x128xf32>
    %c0_15 = arith.constant 0 : index
    %c0_16 = arith.constant 0 : index
    %29 = vector.load %arg8[%c0_15, %c0_16] : memref<64x128xf32, #tpu.memory_space<vmem>>, vector<64x128xf32>
    tpu.vector_store %arg8[%c0_15, %c0_16], %20 {strides = array<i32>} : memref<64x128xf32, #tpu.memory_space<vmem>>, vector<64x128xf32>,
    %c0_17 = arith.constant 0 : index
    %c0_18 = arith.constant 0 : index
    %30 = vector.load %arg9[%c0_17, %c0_18] : memref<64x128xf32, #tpu.memory_space<vmem>>, vector<64x128xf32>
    tpu.vector_store %arg9[%c0_17, %c0_18], %28 {strides = array<i32>} : memref<64x128xf32, #tpu.memory_space<vmem>>, vector<64x128xf32>,
    return
  }
  func.func @transform_0(%arg0: i32) -> i32 {
    %c0_i32 = arith.constant 0 : i32
    %c0_i32_0 = arith.constant 0 : i32
    return %c0_i32 : i32
  }
  func.func @transform_1(%arg0: i32) -> (i32, i32) {
    %c0_i32 = arith.constant 0 : i32
    %c0_i32_0 = arith.constant 0 : i32
    return %arg0, %c0_i32 : i32, i32
  }
  func.func @transform_2(%arg0: i32) -> (i32, i32) {
    %c0_i32 = arith.constant 0 : i32
    %c0_i32_0 = arith.constant 0 : i32
    return %arg0, %c0_i32 : i32, i32
  }
  func.func @transform_3(%arg0: i32) -> (i32, i32) {
    %c0_i32 = arith.constant 0 : i32
    %c0_i32_0 = arith.constant 0 : i32
    %c0_i32_1 = arith.constant 0 : i32
    return %c0_i32, %c0_i32_0 : i32, i32
  }
  func.func @transform_4(%arg0: i32) -> (i32, i32) {
    %c0_i32 = arith.constant 0 : i32
    %c0_i32_0 = arith.constant 0 : i32
    %c0_i32_1 = arith.constant 0 : i32
    return %c0_i32, %c0_i32_0 : i32, i32
  }
  func.func @transform_5(%arg0: i32) -> (i32, i32) {
    %c0_i32 = arith.constant 0 : i32
    %c0_i32_0 = arith.constant 0 : i32
    %c0_i32_1 = arith.constant 0 : i32
    return %c0_i32, %c0_i32_0 : i32, i32
  }
  func.func @transform_6(%arg0: i32) -> (i32, i32) {
    %c0_i32 = arith.constant 0 : i32
    %c0_i32_0 = arith.constant 0 : i32
    %c0_i32_1 = arith.constant 0 : i32
    return %c0_i32, %c0_i32_0 : i32, i32
  }
  func.func @transform_7(%arg0: i32) -> (i32, i32) {
    %c0_i32 = arith.constant 0 : i32
    %c0_i32_0 = arith.constant 0 : i32
    return %arg0, %c0_i32 : i32, i32
  }
  func.func @transform_8(%arg0: i32) -> (i32, i32) {
    %c0_i32 = arith.constant 0 : i32
    %c0_i32_0 = arith.constant 0 : i32
    return %arg0, %c0_i32 : i32, i32
  }
}

</mosaic_0001>

<llo_original>
// kernel: tpu_custom_call.1
$region0: #{tpu_custom_call.1}
  #allocation0 [shape = 'u32[]', space=smem, size = 0x4, offset = 0x4, fixed_abs, tag = 'smem constant byte address 0x4 - core index']
  #allocation1 [shape = 'u32[144,128]{1,0:T(1,128)}', space=vmem, size = 0x12000, scoped, tag = 'internal scratch']
  %s0 = inlined_call_operand.hbm [shape: f32[3], index: 0, kind: input, shape index: {}]
  %s1 = inlined_call_operand.hbm [shape: f32[128,128], index: 1, kind: input, shape index: {}]
  %s2 = inlined_call_operand.hbm [shape: f32[128,128], index: 2, kind: input, shape index: {}]
  %s3 = inlined_call_operand.hbm [shape: f32[128,128], index: 3, kind: input, shape index: {}]
  %s4 = inlined_call_operand.hbm [shape: f32[128,128], index: 4, kind: input, shape index: {}]
  %s5 = inlined_call_operand.hbm [shape: f32[128,128], index: 5, kind: input, shape index: {}]
  %s6 = inlined_call_operand.hbm [shape: f32[128,128], index: 6, kind: input, shape index: {}]
  %s7 = inlined_call_operand.hbm [shape: f32[128,128], index: 7, kind: output, shape index: {0}]
  %s8 = inlined_call_operand.hbm [shape: f32[128,128], index: 8, kind: output, shape index: {1}]
  %9 = xla_tuple %s7, %s8
  %s10 = sld [smem:[#allocation0]]
  $region97: #{tpu_custom_call.1} parent=0
    _
  %s12 = ssub.s32 1, %s10
  %s13 = scalar_select 0, %s12, %s10
  $region1: #{tpu_custom_call.1} parent=0
    #allocation2 [shape = 'u8[512]{0}', space=smem, size = 0x200, scoped, tag = 'input window, operand 0, single buffered']
    #allocation3 [shape = 's32[2]{0}', space=sflag, size = 0x8, scoped, tag = 'scoped memory for tpu_custom_call.1']
    #allocation4 [shape = 's32[2]{0}', space=sflag, size = 0x8, scoped, tag = 'scoped memory for tpu_custom_call.1']
    #allocation5 [shape = 's32[2]{0}', space=sflag, size = 0x8, scoped, tag = 'scoped memory for tpu_custom_call.1']
    #allocation6 [shape = 'u8[65536]{0}', space=vmem, size = 0x10000, scoped, tag = 'input window, operand 1']
    #allocation7 [shape = 'u8[65536]{0}', space=vmem, size = 0x10000, scoped, tag = 'input window, operand 2']
    #allocation8 [shape = 's32[2]{0}', space=sflag, size = 0x8, scoped, tag = 'scoped memory for tpu_custom_call.1']
    #allocation9 [shape = 'u8[65536]{0}', space=vmem, size = 0x10000, scoped, tag = 'input window, operand 3, single buffered']
    #allocation10 [shape = 'u8[65536]{0}', space=vmem, size = 0x10000, scoped, tag = 'input window, operand 4, single buffered']
    #allocation11 [shape = 's32[1]{0}', space=sflag, size = 0x4, scoped, tag = 'scoped memory for tpu_custom_call.1']
    #allocation12 [shape = 'u8[65536]{0}', space=vmem, size = 0x10000, scoped, tag = 'input window, operand 5, single buffered']
    #allocation13 [shape = 'u8[65536]{0}', space=vmem, size = 0x10000, scoped, tag = 'input window, operand 6, single buffered']
    #allocation14 [shape = 's32[1]{0}', space=sflag, size = 0x4, scoped, tag = 'scoped memory for tpu_custom_call.1']
    #allocation15 [shape = 'u8[65536]{0}', space=vmem, size = 0x10000, scoped, tag = 'output window, operand 0']
    #allocation16 [shape = 'u8[65536]{0}', space=vmem, size = 0x10000, scoped, tag = 'output window, operand 1']
    #allocation17 [shape = 's32[2]{0}', space=sflag, size = 0x8, scoped, tag = 'scoped memory for tpu_custom_call.1']
    %14 = vsyncpa [#allocation5], 0
    %15 = vsyncpa [#allocation3], 0
    %s16 = scalar_lea.sflag [#allocation3], 1
    %17 = vsyncpa %s16, 0
    %18 = vsyncpa [#allocation8], 0
    %s19 = scalar_lea.sflag [#allocation8], 1
    %20 = vsyncpa %s19, 0
    %21 = vsyncpa [#allocation11], 0
    %22 = vsyncpa [#allocation14], 0
    %23 = vsyncpa [#allocation4], 0
    %s24 = scalar_lea.sflag [#allocation4], 1
    %25 = vsyncpa %s24, 0
    %26 = vsyncpa [#allocation17], 0
    %s27 = scalar_lea.sflag [#allocation17], 1
    %28 = vsyncpa %s27, 0
    loop: start=0, step=1, limit=4
    $region2: #{tpu_custom_call.1} parent=1 // loop_pre_header
      _
    $region3: #{tpu_custom_call.1} parent=1 // loop_header
      %s30 = sphi 0, %s34
      %p31 = scmp.ge.s32.totalorder %s30, 4
      %s38 = sphi 0, %s38
      %s40 = sphi 0, %s38
      %s41 = sphi 0, %s40
      %s55 = sphi 0, %s41
      %s61 = sphi 0, %s63
      %s64 = sphi 0, %s61
      %s65 = sphi 0, %s64
      %s81 = sphi 0, %s65
      %s87 = sphi 0, %s89
      %s90 = sphi 0, %s87
      %s91 = sphi 0, %s90
      %s107 = sphi 0, %s91
      %s111 = sphi 0, %s111
      %s113 = sphi 0, %s111
      %s114 = sphi 0, %s113
      %s128 = sphi 0, %s114
      %s132 = sphi 0, %s132
      %s134 = sphi 0, %s132
      %s135 = sphi 0, %s134
      %s149 = sphi 0, %s135
      %s153 = sphi 0, %s153
      %s155 = sphi 0, %s153
      %s156 = sphi 0, %s155
      %s170 = sphi 0, %s156
      %s174 = sphi 0, %s174
      %s176 = sphi 0, %s174
      %s177 = sphi 0, %s176
      %s191 = sphi 0, %s177
      %s197 = sphi 0, %s199
      %s200 = sphi 0, %s197
      %s201 = sphi 0, %s200
      %s217 = sphi 0, %s201
      %s223 = sphi 0, %s225
      %s226 = sphi 0, %s223
      %s227 = sphi 0, %s226
      %s243 = sphi 0, %s227
    $region4: #{tpu_custom_call.1} parent=1 // loop_header_branch
      %33 = sbr.rel (%p31) target = $region8
    $region5: #{tpu_custom_call.1} parent=1 // loop_body
      %s35 = ssub.s32 %s30, 1
      %s36 = ssub.s32 %s30, 2
      %s37 = sadd.s32 %s30, 1
      %s39 = sadd.s32 %s38, 1
      %p42 = scmp.eq.s32.totalorder %s30, 1
      %p43 = scmp.ne.s32.totalorder %s38, %s40
      %p44 = scmp.eq.s32.totalorder %s30, 0
      %p45 = por %p43, %p44
      %p46 = scmp.ne.s32.totalorder %s38, %s40
      %p47 = scmp.eq.s32.totalorder %s35, 1
      %p48 = por %p46, %p47
      %p49 = scmp.ne.s32.totalorder %s40, %s41
      %p50 = scmp.eq.s32.totalorder %s35, 0
      %p51 = por %p49, %p50
      %p52 = scmp.ne.s32.totalorder %s40, %s41
      %p53 = scmp.eq.s32.totalorder %s36, 1
      %p54 = por %p52, %p53
      %p56 = scmp.ne.s32.totalorder %s41, %s55
      %p57 = scmp.eq.s32.totalorder %s36, 0
      %p58 = por %p56, %p57
      %s59 = ssub.s32 %s30, %s37
      %p60 = scmp.eq.s32.totalorder %s59, 0
      %s62 = sadd.s32 %s61, 1
      %s63 = scalar_select %p60, %s61, %s62
      %p66 = pneg %p60
      %p67 = scmp.eq.s32.totalorder %s30, 1
      %p68 = por %p66, %p67
      %p69 = scmp.ne.s32.totalorder %s61, %s64
      %p70 = scmp.eq.s32.totalorder %s30, 0
      %p71 = por %p69, %p70
      %p72 = scmp.ne.s32.totalorder %s61, %s64
      %p73 = scmp.eq.s32.totalorder %s35, 1
      %p74 = por %p72, %p73
      %p75 = scmp.ne.s32.totalorder %s64, %s65
      %p76 = scmp.eq.s32.totalorder %s35, 0
      %p77 = por %p75, %p76
      %p78 = scmp.ne.s32.totalorder %s64, %s65
      %p79 = scmp.eq.s32.totalorder %s36, 1
      %p80 = por %p78, %p79
      %p82 = scmp.ne.s32.totalorder %s65, %s81
      %p83 = scmp.eq.s32.totalorder %s36, 0
      %p84 = por %p82, %p83
      %s85 = ssub.s32 %s30, %s37
      %p86 = scmp.eq.s32.totalorder %s85, 0
      %s88 = sadd.s32 %s87, 1
      %s89 = scalar_select %p86, %s87, %s88
      %p92 = pneg %p86
      %p93 = scmp.eq.s32.totalorder %s30, 1
      %p94 = por %p92, %p93
      %p95 = scmp.ne.s32.totalorder %s87, %s90
      %p96 = scmp.eq.s32.totalorder %s30, 0
      %p97 = por %p95, %p96
      %p98 = scmp.ne.s32.totalorder %s87, %s90
      %p99 = scmp.eq.s32.totalorder %s35, 1
      %p100 = por %p98, %p99
      %p101 = scmp.ne.s32.totalorder %s90, %s91
      %p102 = scmp.eq.s32.totalorder %s35, 0
      %p103 = por %p101, %p102
      %p104 = scmp.ne.s32.totalorder %s90, %s91
      %p105 = scmp.eq.s32.totalorder %s36, 1
      %p106 = por %p104, %p105
      %p108 = scmp.ne.s32.totalorder %s91, %s107
      %p109 = scmp.eq.s32.totalorder %s36, 0
      %p110 = por %p108, %p109
      %s112 = sadd.s32 %s111, 1
      %p115 = scmp.eq.s32.totalorder %s30, 1
      %p116 = scmp.ne.s32.totalorder %s111, %s113
      %p117 = scmp.eq.s32.totalorder %s30, 0
      %p118 = por %p116, %p117
      %p119 = scmp.ne.s32.totalorder %s111, %s113
      %p120 = scmp.eq.s32.totalorder %s35, 1
      %p121 = por %p119, %p120
      %p122 = scmp.ne.s32.totalorder %s113, %s114
      %p123 = scmp.eq.s32.totalorder %s35, 0
      %p124 = por %p122, %p123
      %p125 = scmp.ne.s32.totalorder %s113, %s114
      %p126 = scmp.eq.s32.totalorder %s36, 1
      %p127 = por %p125, %p126
      %p129 = scmp.ne.s32.totalorder %s114, %s128
      %p130 = scmp.eq.s32.totalorder %s36, 0
      %p131 = por %p129, %p130
      %s133 = sadd.s32 %s132, 1
      %p136 = scmp.eq.s32.totalorder %s30, 1
      %p137 = scmp.ne.s32.totalorder %s132, %s134
      %p138 = scmp.eq.s32.totalorder %s30, 0
      %p139 = por %p137, %p138
      %p140 = scmp.ne.s32.totalorder %s132, %s134
      %p141 = scmp.eq.s32.totalorder %s35, 1
      %p142 = por %p140, %p141
      %p143 = scmp.ne.s32.totalorder %s134, %s135
      %p144 = scmp.eq.s32.totalorder %s35, 0
      %p145 = por %p143, %p144
      %p146 = scmp.ne.s32.totalorder %s134, %s135
      %p147 = scmp.eq.s32.totalorder %s36, 1
      %p148 = por %p146, %p147
      %p150 = scmp.ne.s32.totalorder %s135, %s149
      %p151 = scmp.eq.s32.totalorder %s36, 0
      %p152 = por %p150, %p151
      %s154 = sadd.s32 %s153, 1
      %p157 = scmp.eq.s32.totalorder %s30, 1
      %p158 = scmp.ne.s32.totalorder %s153, %s155
      %p159 = scmp.eq.s32.totalorder %s30, 0
      %p160 = por %p158, %p159
      %p161 = scmp.ne.s32.totalorder %s153, %s155
      %p162 = scmp.eq.s32.totalorder %s35, 1
      %p163 = por %p161, %p162
      %p164 = scmp.ne.s32.totalorder %s155, %s156
      %p165 = scmp.eq.s32.totalorder %s35, 0
      %p166 = por %p164, %p165
      %p167 = scmp.ne.s32.totalorder %s155, %s156
      %p168 = scmp.eq.s32.totalorder %s36, 1
      %p169 = por %p167, %p168
      %p171 = scmp.ne.s32.totalorder %s156, %s170
      %p172 = scmp.eq.s32.totalorder %s36, 0
      %p173 = por %p171, %p172
      %s175 = sadd.s32 %s174, 1
      %p178 = scmp.eq.s32.totalorder %s30, 1
      %p179 = scmp.ne.s32.totalorder %s174, %s176
      %p180 = scmp.eq.s32.totalorder %s30, 0
      %p181 = por %p179, %p180
      %p182 = scmp.ne.s32.totalorder %s174, %s176
      %p183 = scmp.eq.s32.totalorder %s35, 1
      %p184 = por %p182, %p183
      %p185 = scmp.ne.s32.totalorder %s176, %s177
      %p186 = scmp.eq.s32.totalorder %s35, 0
      %p187 = por %p185, %p186
      %p188 = scmp.ne.s32.totalorder %s176, %s177
      %p189 = scmp.eq.s32.totalorder %s36, 1
      %p190 = por %p188, %p189
      %p192 = scmp.ne.s32.totalorder %s177, %s191
      %p193 = scmp.eq.s32.totalorder %s36, 0
      %p194 = por %p192, %p193
      %s195 = ssub.s32 %s30, %s37
      %p196 = scmp.eq.s32.totalorder %s195, 0
      %s198 = sadd.s32 %s197, 1
      %s199 = scalar_select %p196, %s197, %s198
      %p202 = pneg %p196
      %p203 = scmp.eq.s32.totalorder %s30, 1
      %p204 = por %p202, %p203
      %p205 = scmp.ne.s32.totalorder %s197, %s200
      %p206 = scmp.eq.s32.totalorder %s30, 0
      %p207 = por %p205, %p206
      %p208 = scmp.ne.s32.totalorder %s197, %s200
      %p209 = scmp.eq.s32.totalorder %s35, 1
      %p210 = por %p208, %p209
      %p211 = scmp.ne.s32.totalorder %s200, %s201
      %p212 = scmp.eq.s32.totalorder %s35, 0
      %p213 = por %p211, %p212
      %p214 = scmp.ne.s32.totalorder %s200, %s201
      %p215 = scmp.eq.s32.totalorder %s36, 1
      %p216 = por %p214, %p215
      %p218 = scmp.ne.s32.totalorder %s201, %s217
      %p219 = scmp.eq.s32.totalorder %s36, 0
      %p220 = por %p218, %p219
      %s221 = ssub.s32 %s30, %s37
      %p222 = scmp.eq.s32.totalorder %s221, 0
      %s224 = sadd.s32 %s223, 1
      %s225 = scalar_select %p222, %s223, %s224
      %p228 = pneg %p222
      %p229 = scmp.eq.s32.totalorder %s30, 1
      %p230 = por %p228, %p229
      %p231 = scmp.ne.s32.totalorder %s223, %s226
      %p232 = scmp.eq.s32.totalorder %s30, 0
      %p233 = por %p231, %p232
      %p234 = scmp.ne.s32.totalorder %s223, %s226
      %p235 = scmp.eq.s32.totalorder %s35, 1
      %p236 = por %p234, %p235
      %p237 = scmp.ne.s32.totalorder %s226, %s227
      %p238 = scmp.eq.s32.totalorder %s35, 0
      %p239 = por %p237, %p238
      %p240 = scmp.ne.s32.totalorder %s226, %s227
      %p241 = scmp.eq.s32.totalorder %s36, 1
      %p242 = por %p240, %p241
      %p244 = scmp.ne.s32.totalorder %s227, %s243
      %p245 = scmp.eq.s32.totalorder %s36, 0
      %p246 = por %p244, %p245
      %p247 = scmp.le.s32.totalorder 1, %s30
      %p248 = scmp.lt.s32.totalorder %s30, 3
      %p249 = pnand %p247, %p248
      %p250 = pneg %p249
      // Predicated region
      $region9: #{tpu_custom_call.1} parent=5 // pred_check
        _
      $region10: #{tpu_custom_call.1} parent=5 // pred_check_branch
        %252 = sbr.rel (%p249) target = $region12
      $region11: #{tpu_custom_call.1} parent=5 // pred_region
        %s253 = ssub.s32 %s30, 1
        // Predicated region
        $region13: #{tpu_custom_call.1} parent=11 // pred_check
          %p254 = pneg %p51
        $region14: #{tpu_custom_call.1} parent=11 // pred_check_branch
          %256 = sbr.rel (%p254) target = $region16
        $region15: #{tpu_custom_call.1} parent=11 // pred_region
          %s258 = ssub.s32 16, 16
          %259 = vsyncadd [#allocation5], %s258
          %262 = dma.hbm_to_smem %s0, 16, [#allocation2], [#allocation5]
        $region16: #{tpu_custom_call.1} parent=11 // pred_fallthru
          _
        // Predicated region
        $region17: #{tpu_custom_call.1} parent=11 // pred_check
          %p263 = pneg %p124
        $region18: #{tpu_custom_call.1} parent=11 // pred_check_branch
          %265 = sbr.rel (%p263) target = $region20
        $region19: #{tpu_custom_call.1} parent=11 // pred_region
          %s267 = ssub.s32 2048, 2048
          %268 = vsyncadd [#allocation8], %s267
          %s269 = sshll.u32 [#allocation9], 4
          %s270 = int_to_ptr.vmem [resolvable:$true] %s269
          %275 = dma.hbm_to_vmem [thread:$0]  %s3, 2048, %s270, [#allocation8], 128, 128, 8
        $region20: #{tpu_custom_call.1} parent=11 // pred_fallthru
          _
        // Predicated region
        $region21: #{tpu_custom_call.1} parent=11 // pred_check
          %p276 = pneg %p145
        $region22: #{tpu_custom_call.1} parent=11 // pred_check_branch
          %278 = sbr.rel (%p276) target = $region24
        $region23: #{tpu_custom_call.1} parent=11 // pred_region
          %s280 = ssub.s32 2048, 2048
          %281 = vsyncadd [#allocation11], %s280
          %s282 = sshll.u32 [#allocation10], 4
          %s283 = int_to_ptr.vmem [resolvable:$true] %s282
          %288 = dma.hbm_to_vmem [thread:$0]  %s4, 2048, %s283, [#allocation11], 128, 128, 8
        $region24: #{tpu_custom_call.1} parent=11 // pred_fallthru
          _
        // Predicated region
        $region25: #{tpu_custom_call.1} parent=11 // pred_check
          %p289 = pneg %p166
        $region26: #{tpu_custom_call.1} parent=11 // pred_check_branch
          %291 = sbr.rel (%p289) target = $region28
        $region27: #{tpu_custom_call.1} parent=11 // pred_region
          %s293 = ssub.s32 2048, 2048
          %294 = vsyncadd [#allocation11], %s293
          %s295 = sshll.u32 [#allocation12], 4
          %s296 = int_to_ptr.vmem [resolvable:$true] %s295
          %301 = dma.hbm_to_vmem [thread:$0]  %s5, 2048, %s296, [#allocation11], 128, 128, 8
        $region28: #{tpu_custom_call.1} parent=11 // pred_fallthru
          _
        // Predicated region
        $region29: #{tpu_custom_call.1} parent=11 // pred_check
          %p302 = pneg %p187
        $region30: #{tpu_custom_call.1} parent=11 // pred_check_branch
          %304 = sbr.rel (%p302) target = $region32
        $region31: #{tpu_custom_call.1} parent=11 // pred_region
          %s306 = ssub.s32 2048, 2048
          %307 = vsyncadd [#allocation14], %s306
          %s308 = sshll.u32 [#allocation13], 4
          %s309 = int_to_ptr.vmem [resolvable:$true] %s308
          %314 = dma.hbm_to_vmem [thread:$0]  %s6, 2048, %s309, [#allocation14], 128, 128, 8
        $region32: #{tpu_custom_call.1} parent=11 // pred_fallthru
          _
      $region12: #{tpu_custom_call.1} parent=5 // pred_fallthru
        _
      %p315 = scmp.lt.s32.totalorder %s30, 2
      // Predicated region
      $region33: #{tpu_custom_call.1} parent=5 // pred_check
        %p316 = pneg %p315
      $region34: #{tpu_custom_call.1} parent=5 // pred_check_branch
        %318 = sbr.rel (%p316) target = $region36
      $region35: #{tpu_custom_call.1} parent=5 // pred_region
        // Predicated region
        $region37: #{tpu_custom_call.1} parent=35 // pred_check
          %p319 = pneg %p71
        $region38: #{tpu_custom_call.1} parent=35 // pred_check_branch
          %321 = sbr.rel (%p319) target = $region40
        $region39: #{tpu_custom_call.1} parent=35 // pred_region
          %s322 = sand.u32 %s61, 1
          %s323 = scalar_lea.sflag [#allocation3], %s322
          %s324 = sand.u32 %s61, 1
          %s325 = smul.addr %s324, 64
          %s326 = scalar_lea.vmem [#allocation6], %s325
          %s327 = smul.u32 8, %s30
          %s329 = ssub.s32 1024, 1024
          %330 = vsyncadd %s323, %s329
          %s331 = smul.addr %s327, 128
          %s332 = scalar_lea.hbm %s1, %s331
          %s333 = sshll.u32 %s326, 4
          %s334 = int_to_ptr.vmem [resolvable:$true] %s333
          %339 = dma.hbm_to_vmem [thread:$0]  %s332, 1024, %s334, %s323, 128, 128, 8
        $region40: #{tpu_custom_call.1} parent=35 // pred_fallthru
          _
        // Predicated region
        $region41: #{tpu_custom_call.1} parent=35 // pred_check
          %p340 = pneg %p97
        $region42: #{tpu_custom_call.1} parent=35 // pred_check_branch
          %342 = sbr.rel (%p340) target = $region44
        $region43: #{tpu_custom_call.1} parent=35 // pred_region
          %s343 = sand.u32 %s30, 1
          %s344 = scalar_lea.sflag [#allocation8], %s343
          %s345 = sand.u32 %s87, 1
          %s346 = smul.addr %s345, 64
          %s347 = scalar_lea.vmem [#allocation7], %s346
          %s348 = smul.u32 8, %s30
          %s350 = ssub.s32 1024, 1024
          %351 = vsyncadd %s344, %s350
          %s352 = smul.addr %s348, 128
          %s353 = scalar_lea.hbm %s2, %s352
          %s354 = sshll.u32 %s347, 4
          %s355 = int_to_ptr.vmem [resolvable:$true] %s354
          %360 = dma.hbm_to_vmem [thread:$0]  %s353, 1024, %s355, %s344, 128, 128, 8
        $region44: #{tpu_custom_call.1} parent=35 // pred_fallthru
          _
      $region36: #{tpu_custom_call.1} parent=5 // pred_fallthru
        _
      %p361 = scmp.le.s32.totalorder 1, %s30
      %p362 = scmp.lt.s32.totalorder %s30, 3
      %p363 = pnand %p361, %p362
      %p364 = pneg %p363
      // Predicated region
      $region45: #{tpu_custom_call.1} parent=5 // pred_check
        _
      $region46: #{tpu_custom_call.1} parent=5 // pred_check_branch
        %366 = sbr.rel (%p363) target = $region48
      $region47: #{tpu_custom_call.1} parent=5 // pred_region
        %s367 = ssub.s32 %s30, 1
        // Predicated region
        $region49: #{tpu_custom_call.1} parent=47 // pred_check
          %p368 = pneg %p51
        $region50: #{tpu_custom_call.1} parent=47 // pred_check_branch
          %370 = sbr.rel (%p368) target = $region52
        $region51: #{tpu_custom_call.1} parent=47 // pred_region
          %371 = dma.done [#allocation5], 16
        $region52: #{tpu_custom_call.1} parent=47 // pred_fallthru
          _
        %s372 = sand.u32 %s64, 1
        %s373 = scalar_lea.sflag [#allocation3], %s372
        %s374 = sand.u32 %s64, 1
        %s375 = smul.addr %s374, 64
        %s376 = scalar_lea.vmem [#allocation6], %s375
        // Predicated region
        $region53: #{tpu_custom_call.1} parent=47 // pred_check
          %p377 = pneg %p77
        $region54: #{tpu_custom_call.1} parent=47 // pred_check_branch
          %379 = sbr.rel (%p377) target = $region56
        $region55: #{tpu_custom_call.1} parent=47 // pred_region
          %380 = dma.done %s373, 1024
        $region56: #{tpu_custom_call.1} parent=47 // pred_fallthru
          _
        %s381 = sand.u32 %s35, 1
        %s382 = scalar_lea.sflag [#allocation8], %s381
        %s383 = sand.u32 %s90, 1
        %s384 = smul.addr %s383, 64
        %s385 = scalar_lea.vmem [#allocation7], %s384
        // Predicated region
        $region57: #{tpu_custom_call.1} parent=47 // pred_check
          %p386 = pneg %p103
        $region58: #{tpu_custom_call.1} parent=47 // pred_check_branch
          %388 = sbr.rel (%p386) target = $region60
        $region59: #{tpu_custom_call.1} parent=47 // pred_region
          %389 = dma.done %s382, 1024
        $region60: #{tpu_custom_call.1} parent=47 // pred_fallthru
          _
        // Predicated region
        $region61: #{tpu_custom_call.1} parent=47 // pred_check
          %p390 = pneg %p124
        $region62: #{tpu_custom_call.1} parent=47 // pred_check_branch
          %392 = sbr.rel (%p390) target = $region64
        $region63: #{tpu_custom_call.1} parent=47 // pred_region
          %393 = dma.done [#allocation8], 2048
        $region64: #{tpu_custom_call.1} parent=47 // pred_fallthru
          _
        // Predicated region
        $region65: #{tpu_custom_call.1} parent=47 // pred_check
          %p394 = pneg %p145
        $region66: #{tpu_custom_call.1} parent=47 // pred_check_branch
          %396 = sbr.rel (%p394) target = $region68
        $region67: #{tpu_custom_call.1} parent=47 // pred_region
          %397 = dma.done [#allocation11], 2048
        $region68: #{tpu_custom_call.1} parent=47 // pred_fallthru
          _
        // Predicated region
        $region69: #{tpu_custom_call.1} parent=47 // pred_check
          %p398 = pneg %p166
        $region70: #{tpu_custom_call.1} parent=47 // pred_check_branch
          %400 = sbr.rel (%p398) target = $region72
        $region71: #{tpu_custom_call.1} parent=47 // pred_region
          %401 = dma.done [#allocation11], 2048
        $region72: #{tpu_custom_call.1} parent=47 // pred_fallthru
          _
        // Predicated region
        $region73: #{tpu_custom_call.1} parent=47 // pred_check
          %p402 = pneg %p187
        $region74: #{tpu_custom_call.1} parent=47 // pred_check_branch
          %404 = sbr.rel (%p402) target = $region76
        $region75: #{tpu_custom_call.1} parent=47 // pred_region
          %405 = dma.done [#allocation14], 2048
        $region76: #{tpu_custom_call.1} parent=47 // pred_fallthru
          _
        %406 = sfence
        %p407 = pneg %p51
        %p408 = pneg %p48
        %s409 = sand.u32 %s64, 1
        %s410 = scalar_lea.sflag [#allocation3], %s409
        %s411 = sand.u32 %s64, 1
        %s412 = smul.addr %s411, 64
        %s413 = scalar_lea.vmem [#allocation6], %s412
        %p414 = pneg %p77
        %p415 = pneg %p74
        %s416 = sand.u32 %s35, 1
        %s417 = scalar_lea.sflag [#allocation8], %s416
        %s418 = sand.u32 %s90, 1
        %s419 = smul.addr %s418, 64
        %s420 = scalar_lea.vmem [#allocation7], %s419
        %p421 = pneg %p103
        %p422 = pneg %p100
        %p423 = pneg %p124
        %p424 = pneg %p121
        %p425 = pneg %p145
        %p426 = pneg %p142
        %p427 = pneg %p166
        %p428 = pneg %p163
        %p429 = pneg %p187
        %p430 = pneg %p184
        %p431 = pneg %p213
        %p432 = pneg %p210
        %s433 = sand.u32 %s200, 1
        %s434 = scalar_lea.sflag [#allocation4], %s433
        %s435 = sand.u32 %s200, 1
        %s436 = smul.addr %s435, 64
        %s437 = scalar_lea.vmem [#allocation15], %s436
        %p438 = pneg %p239
        %p439 = pneg %p236
        %s440 = sand.u32 %s226, 1
        %s441 = scalar_lea.sflag [#allocation17], %s440
        %s442 = sand.u32 %s226, 1
        %s443 = smul.addr %s442, 64
        %s444 = scalar_lea.vmem [#allocation16], %s443
        %s445 = smul.u32 8, %s35
        %s446 = smul.u32 8, %s35
        %s447 = smul.u32 8, %s35
        %s448 = smul.u32 8, %s35
        %s449 = sld [smem:[#allocation2]]
        %s450 = sld [smem:[#allocation2 + $0x1]]
        %s451 = sld [smem:[#allocation2 + $0x2]]
        %v452 = vld [vmem:[%s376] sm:$0xff]
        %v453 = vld [vmem:[%s376 + $0x8] sm:$0xff]
        %v454 = vld [vmem:[%s376 + $0x10] sm:$0xff]
        %v455 = vld [vmem:[%s376 + $0x18] sm:$0xff]
        %v456 = vld [vmem:[%s376 + $0x20] sm:$0xff]
        %v457 = vld [vmem:[%s376 + $0x28] sm:$0xff]
        %v458 = vld [vmem:[%s376 + $0x30] sm:$0xff]
        %v459 = vld [vmem:[%s376 + $0x38] sm:$0xff]
        %v460 = vld [vmem:[%s385] sm:$0xff]
        %v461 = vld [vmem:[%s385 + $0x8] sm:$0xff]
        %v462 = vld [vmem:[%s385 + $0x10] sm:$0xff]
        %v463 = vld [vmem:[%s385 + $0x18] sm:$0xff]
        %v464 = vld [vmem:[%s385 + $0x20] sm:$0xff]
        %v465 = vld [vmem:[%s385 + $0x28] sm:$0xff]
        %v466 = vld [vmem:[%s385 + $0x30] sm:$0xff]
        %v467 = vld [vmem:[%s385 + $0x38] sm:$0xff]
        %v468 = vld [vmem:[#allocation9] sm:$0xff]
        %v469 = vld [vmem:[#allocation9 + $0x8] sm:$0xff]
        %v470 = vld [vmem:[#allocation9 + $0x10] sm:$0xff]
        %v471 = vld [vmem:[#allocation9 + $0x18] sm:$0xff]
        %v472 = vld [vmem:[#allocation9 + $0x20] sm:$0xff]
        %v473 = vld [vmem:[#allocation9 + $0x28] sm:$0xff]
        %v474 = vld [vmem:[#allocation9 + $0x30] sm:$0xff]
        %v475 = vld [vmem:[#allocation9 + $0x38] sm:$0xff]
        %v476 = vld [vmem:[#allocation9 + $0x40] sm:$0xff]
        %v477 = vld [vmem:[#allocation9 + $0x48] sm:$0xff]
        %v478 = vld [vmem:[#allocation9 + $0x50] sm:$0xff]
        %v479 = vld [vmem:[#allocation9 + $0x58] sm:$0xff]
        %v480 = vld [vmem:[#allocation9 + $0x60] sm:$0xff]
        %v481 = vld [vmem:[#allocation9 + $0x68] sm:$0xff]
        %v482 = vld [vmem:[#allocation9 + $0x70] sm:$0xff]
        %v483 = vld [vmem:[#allocation9 + $0x78] sm:$0xff]
        %484 = vmatprep.subr.mxu0 0.0
        %485 = vmatpush1.msra.mxu0 %v483
        %486 = vmatprep.subr.mxu0 0.0
        %487 = vmatpush1.msra.mxu0 %v482
        %488 = vmatprep.subr.mxu0 0.0
        %489 = vmatpush1.msra.mxu0 %v481
        %490 = vmatprep.subr.mxu0 0.0
        %491 = vmatpush1.msra.mxu0 %v480
        %492 = vmatprep.subr.mxu0 0.0
        %493 = vmatpush1.msra.mxu0 %v479
        %494 = vmatprep.subr.mxu0 0.0
        %495 = vmatpush1.msra.mxu0 %v478
        %496 = vmatprep.subr.mxu0 0.0
        %497 = vmatpush1.msra.mxu0 %v477
        %498 = vmatprep.subr.mxu0 0.0
        %499 = vmatpush1.msra.mxu0 %v476
        %500 = vmatprep.subr.mxu0 0.0
        %501 = vmatpush1.msra.mxu0 %v475
        %502 = vmatprep.subr.mxu0 0.0
        %503 = vmatpush1.msra.mxu0 %v474
        %504 = vmatprep.subr.mxu0 0.0
        %505 = vmatpush1.msra.mxu0 %v473
        %506 = vmatprep.subr.mxu0 0.0
        %507 = vmatpush1.msra.mxu0 %v472
        %508 = vmatprep.subr.mxu0 0.0
        %509 = vmatpush1.msra.mxu0 %v471
        %510 = vmatprep.subr.mxu0 0.0
        %511 = vmatpush1.msra.mxu0 %v470
        %512 = vmatprep.subr.mxu0 0.0
        %513 = vmatpush1.msra.mxu0 %v469
        %514 = vmatprep.subr.mxu0 0.0
        %515 = vmatpush1.msra.mxu0 %v468
        %516 = vmatprep.subr.mxu0 0.0
        %517 = vmatpush2.msra.mxu0 0.0
        %518 = vmatprep.subr.mxu0 0.0
        %519 = vmatpush2.msra.mxu0 0.0
        %520 = vmatprep.subr.mxu0 0.0
        %521 = vmatpush2.msra.mxu0 0.0
        %522 = vmatprep.subr.mxu0 0.0
        %523 = vmatpush2.msra.mxu0 0.0
        %524 = vmatprep.subr.mxu0 0.0
        %525 = vmatpush2.msra.mxu0 0.0
        %526 = vmatprep.subr.mxu0 0.0
        %527 = vmatpush2.msra.mxu0 0.0
        %528 = vmatprep.subr.mxu0 0.0
        %529 = vmatpush2.msra.mxu0 0.0
        %530 = vmatprep.subr.mxu0 0.0
        %531 = vmatpush2.msra.mxu0 0.0
        %532 = vmatprep.subr.mxu0 0.0
        %533 = vmatpush2.msra.mxu0 0.0
        %534 = vmatprep.subr.mxu0 0.0
        %535 = vmatpush2.msra.mxu0 0.0
        %536 = vmatprep.subr.mxu0 0.0
        %537 = vmatpush2.msra.mxu0 0.0
        %538 = vmatprep.subr.mxu0 0.0
        %539 = vmatpush2.msra.mxu0 0.0
        %540 = vmatprep.subr.mxu0 0.0
        %541 = vmatpush2.msra.mxu0 0.0
        %542 = vmatprep.subr.mxu0 0.0
        %543 = vmatpush2.msra.mxu0 0.0
        %544 = vmatprep.subr.mxu0 0.0
        %545 = vmatpush2.msra.mxu0 0.0
        %546 = vmatprep.subr.mxu0 0.0
        %547 = vmatpush2.msra.mxu0 0.0
        %548 = vmatprep.mubr.f32.mxu0 0.0
        %549 = vmatmul.mubr.f32.gmra.mxu0 %v460
        %v550 = vpop.f32.mrf.mxu0
        %v551 = vadd.f32 0.0, %v550
        %v552 = vpop.f32.mrf.mxu0
        %553 = vmatprep.mubr.f32.mxu0 0.0
        %554 = vmatmul.mubr.f32.gmra.mxu0 %v461
        %v555 = vpop.f32.mrf.mxu0
        %v556 = vadd.f32 0.0, %v555
        %v557 = vpop.f32.mrf.mxu0
        %558 = vmatprep.mubr.f32.mxu0 0.0
        %559 = vmatmul.mubr.f32.gmra.mxu0 %v462
        %v560 = vpop.f32.mrf.mxu0
        %v561 = vadd.f32 0.0, %v560
        %v562 = vpop.f32.mrf.mxu0
        %563 = vmatprep.mubr.f32.mxu0 0.0
        %564 = vmatmul.mubr.f32.gmra.mxu0 %v463
        %v565 = vpop.f32.mrf.mxu0
        %v566 = vadd.f32 0.0, %v565
        %v567 = vpop.f32.mrf.mxu0
        %568 = vmatprep.mubr.f32.mxu0 0.0
        %569 = vmatmul.mubr.f32.gmra.mxu0 %v464
        %v570 = vpop.f32.mrf.mxu0
        %v571 = vadd.f32 0.0, %v570
        %v572 = vpop.f32.mrf.mxu0
        %573 = vmatprep.mubr.f32.mxu0 0.0
        %574 = vmatmul.mubr.f32.gmra.mxu0 %v465
        %v575 = vpop.f32.mrf.mxu0
        %v576 = vadd.f32 0.0, %v575
        %v577 = vpop.f32.mrf.mxu0
        %578 = vmatprep.mubr.f32.mxu0 0.0
        %579 = vmatmul.mubr.f32.gmra.mxu0 %v466
        %v580 = vpop.f32.mrf.mxu0
        %v581 = vadd.f32 0.0, %v580
        %v582 = vpop.f32.mrf.mxu0
        %583 = vmatprep.mubr.f32.mxu0 0.0
        %584 = vmatmul.mubr.f32.gmra.mxu0 %v467
        %v585 = vpop.f32.mrf.mxu0
        %v586 = vadd.f32 0.0, %v585
        %v587 = vpop.f32.mrf.mxu0
        %588 = vdwg.mxu0
        %v589 = vld [vmem:[#allocation10] sm:$0xff]
        %v590 = vld [vmem:[#allocation10 + $0x8] sm:$0xff]
        %v591 = vld [vmem:[#allocation10 + $0x10] sm:$0xff]
        %v592 = vld [vmem:[#allocation10 + $0x18] sm:$0xff]
        %v593 = vld [vmem:[#allocation10 + $0x20] sm:$0xff]
        %v594 = vld [vmem:[#allocation10 + $0x28] sm:$0xff]
        %v595 = vld [vmem:[#allocation10 + $0x30] sm:$0xff]
        %v596 = vld [vmem:[#allocation10 + $0x38] sm:$0xff]
        %v597 = vld [vmem:[#allocation10 + $0x40] sm:$0xff]
        %v598 = vld [vmem:[#allocation10 + $0x48] sm:$0xff]
        %v599 = vld [vmem:[#allocation10 + $0x50] sm:$0xff]
        %v600 = vld [vmem:[#allocation10 + $0x58] sm:$0xff]
        %v601 = vld [vmem:[#allocation10 + $0x60] sm:$0xff]
        %v602 = vld [vmem:[#allocation10 + $0x68] sm:$0xff]
        %v603 = vld [vmem:[#allocation10 + $0x70] sm:$0xff]
        %v604 = vld [vmem:[#allocation10 + $0x78] sm:$0xff]
        %605 = vmatprep.subr.mxu0 0.0
        %606 = vmatpush1.msra.mxu0 %v604
        %607 = vmatprep.subr.mxu0 0.0
        %608 = vmatpush1.msra.mxu0 %v603
        %609 = vmatprep.subr.mxu0 0.0
        %610 = vmatpush1.msra.mxu0 %v602
        %611 = vmatprep.subr.mxu0 0.0
        %612 = vmatpush1.msra.mxu0 %v601
        %613 = vmatprep.subr.mxu0 0.0
        %614 = vmatpush1.msra.mxu0 %v600
        %615 = vmatprep.subr.mxu0 0.0
        %616 = vmatpush1.msra.mxu0 %v599
        %617 = vmatprep.subr.mxu0 0.0
        %618 = vmatpush1.msra.mxu0 %v598
        %619 = vmatprep.subr.mxu0 0.0
        %620 = vmatpush1.msra.mxu0 %v597
        %621 = vmatprep.subr.mxu0 0.0
        %622 = vmatpush1.msra.mxu0 %v596
        %623 = vmatprep.subr.mxu0 0.0
        %624 = vmatpush1.msra.mxu0 %v595
        %625 = vmatprep.subr.mxu0 0.0
        %626 = vmatpush1.msra.mxu0 %v594
        %627 = vmatprep.subr.mxu0 0.0
        %628 = vmatpush1.msra.mxu0 %v593
        %629 = vmatprep.subr.mxu0 0.0
        %630 = vmatpush1.msra.mxu0 %v592
        %631 = vmatprep.subr.mxu0 0.0
        %632 = vmatpush1.msra.mxu0 %v591
        %633 = vmatprep.subr.mxu0 0.0
        %634 = vmatpush1.msra.mxu0 %v590
        %635 = vmatprep.subr.mxu0 0.0
        %636 = vmatpush1.msra.mxu0 %v589
        %637 = vmatprep.subr.mxu0 0.0
        %638 = vmatpush2.msra.mxu0 0.0
        %639 = vmatprep.subr.mxu0 0.0
        %640 = vmatpush2.msra.mxu0 0.0
        %641 = vmatprep.subr.mxu0 0.0
        %642 = vmatpush2.msra.mxu0 0.0
        %643 = vmatprep.subr.mxu0 0.0
        %644 = vmatpush2.msra.mxu0 0.0
        %645 = vmatprep.subr.mxu0 0.0
        %646 = vmatpush2.msra.mxu0 0.0
        %647 = vmatprep.subr.mxu0 0.0
        %648 = vmatpush2.msra.mxu0 0.0
        %649 = vmatprep.subr.mxu0 0.0
        %650 = vmatpush2.msra.mxu0 0.0
        %651 = vmatprep.subr.mxu0 0.0
        %652 = vmatpush2.msra.mxu0 0.0
        %653 = vmatprep.subr.mxu0 0.0
        %654 = vmatpush2.msra.mxu0 0.0
        %655 = vmatprep.subr.mxu0 0.0
        %656 = vmatpush2.msra.mxu0 0.0
        %657 = vmatprep.subr.mxu0 0.0
        %658 = vmatpush2.msra.mxu0 0.0
        %659 = vmatprep.subr.mxu0 0.0
        %660 = vmatpush2.msra.mxu0 0.0
        %661 = vmatprep.subr.mxu0 0.0
        %662 = vmatpush2.msra.mxu0 0.0
        %663 = vmatprep.subr.mxu0 0.0
        %664 = vmatpush2.msra.mxu0 0.0
        %665 = vmatprep.subr.mxu0 0.0
        %666 = vmatpush2.msra.mxu0 0.0
        %667 = vmatprep.subr.mxu0 0.0
        %668 = vmatpush2.msra.mxu0 0.0
        %669 = vmatprep.mubr.f32.mxu0 0.0
        %670 = vmatmul.mubr.f32.gmra.mxu0 %v452
        %v671 = vpop.f32.mrf.mxu0
        %v672 = vadd.f32 0.0, %v671
        %v673 = vpop.f32.mrf.mxu0
        %674 = vmatprep.mubr.f32.mxu0 0.0
        %675 = vmatmul.mubr.f32.gmra.mxu0 %v453
        %v676 = vpop.f32.mrf.mxu0
        %v677 = vadd.f32 0.0, %v676
        %v678 = vpop.f32.mrf.mxu0
        %679 = vmatprep.mubr.f32.mxu0 0.0
        %680 = vmatmul.mubr.f32.gmra.mxu0 %v454
        %v681 = vpop.f32.mrf.mxu0
        %v682 = vadd.f32 0.0, %v681
        %v683 = vpop.f32.mrf.mxu0
        %684 = vmatprep.mubr.f32.mxu0 0.0
        %685 = vmatmul.mubr.f32.gmra.mxu0 %v455
        %v686 = vpop.f32.mrf.mxu0
        %v687 = vadd.f32 0.0, %v686
        %v688 = vpop.f32.mrf.mxu0
        %689 = vmatprep.mubr.f32.mxu0 0.0
        %690 = vmatmul.mubr.f32.gmra.mxu0 %v456
        %v691 = vpop.f32.mrf.mxu0
        %v692 = vadd.f32 0.0, %v691
        %v693 = vpop.f32.mrf.mxu0
        %694 = vmatprep.mubr.f32.mxu0 0.0
        %695 = vmatmul.mubr.f32.gmra.mxu0 %v457
        %v696 = vpop.f32.mrf.mxu0
        %v697 = vadd.f32 0.0, %v696
        %v698 = vpop.f32.mrf.mxu0
        %699 = vmatprep.mubr.f32.mxu0 0.0
        %700 = vmatmul.mubr.f32.gmra.mxu0 %v458
        %v701 = vpop.f32.mrf.mxu0
        %v702 = vadd.f32 0.0, %v701
        %v703 = vpop.f32.mrf.mxu0
        %704 = vmatprep.mubr.f32.mxu0 0.0
        %705 = vmatmul.mubr.f32.gmra.mxu0 %v459
        %v706 = vpop.f32.mrf.mxu0
        %v707 = vadd.f32 0.0, %v706
        %v708 = vpop.f32.mrf.mxu0
        %709 = vdwg.mxu0
        %v710 = vld [vmem:[#allocation12] sm:$0xff]
        %v711 = vld [vmem:[#allocation12 + $0x8] sm:$0xff]
        %v712 = vld [vmem:[#allocation12 + $0x10] sm:$0xff]
        %v713 = vld [vmem:[#allocation12 + $0x18] sm:$0xff]
        %v714 = vld [vmem:[#allocation12 + $0x20] sm:$0xff]
        %v715 = vld [vmem:[#allocation12 + $0x28] sm:$0xff]
        %v716 = vld [vmem:[#allocation12 + $0x30] sm:$0xff]
        %v717 = vld [vmem:[#allocation12 + $0x38] sm:$0xff]
        %v718 = vld [vmem:[#allocation12 + $0x40] sm:$0xff]
        %v719 = vld [vmem:[#allocation12 + $0x48] sm:$0xff]
        %v720 = vld [vmem:[#allocation12 + $0x50] sm:$0xff]
        %v721 = vld [vmem:[#allocation12 + $0x58] sm:$0xff]
        %v722 = vld [vmem:[#allocation12 + $0x60] sm:$0xff]
        %v723 = vld [vmem:[#allocation12 + $0x68] sm:$0xff]
        %v724 = vld [vmem:[#allocation12 + $0x70] sm:$0xff]
        %v725 = vld [vmem:[#allocation12 + $0x78] sm:$0xff]
        %726 = vmatprep.subr.mxu0 0.0
        %727 = vmatpush1.msra.mxu0 %v725
        %728 = vmatprep.subr.mxu0 0.0
        %729 = vmatpush1.msra.mxu0 %v724
        %730 = vmatprep.subr.mxu0 0.0
        %731 = vmatpush1.msra.mxu0 %v723
        %732 = vmatprep.subr.mxu0 0.0
        %733 = vmatpush1.msra.mxu0 %v722
        %734 = vmatprep.subr.mxu0 0.0
        %735 = vmatpush1.msra.mxu0 %v721
        %736 = vmatprep.subr.mxu0 0.0
        %737 = vmatpush1.msra.mxu0 %v720
        %738 = vmatprep.subr.mxu0 0.0
        %739 = vmatpush1.msra.mxu0 %v719
        %740 = vmatprep.subr.mxu0 0.0
        %741 = vmatpush1.msra.mxu0 %v718
        %742 = vmatprep.subr.mxu0 0.0
        %743 = vmatpush1.msra.mxu0 %v717
        %744 = vmatprep.subr.mxu0 0.0
        %745 = vmatpush1.msra.mxu0 %v716
        %746 = vmatprep.subr.mxu0 0.0
        %747 = vmatpush1.msra.mxu0 %v715
        %748 = vmatprep.subr.mxu0 0.0
        %749 = vmatpush1.msra.mxu0 %v714
        %750 = vmatprep.subr.mxu0 0.0
        %751 = vmatpush1.msra.mxu0 %v713
        %752 = vmatprep.subr.mxu0 0.0
        %753 = vmatpush1.msra.mxu0 %v712
        %754 = vmatprep.subr.mxu0 0.0
        %755 = vmatpush1.msra.mxu0 %v711
        %756 = vmatprep.subr.mxu0 0.0
        %757 = vmatpush1.msra.mxu0 %v710
        %758 = vmatprep.subr.mxu0 0.0
        %759 = vmatpush2.msra.mxu0 0.0
        %760 = vmatprep.subr.mxu0 0.0
        %761 = vmatpush2.msra.mxu0 0.0
        %762 = vmatprep.subr.mxu0 0.0
        %763 = vmatpush2.msra.mxu0 0.0
        %764 = vmatprep.subr.mxu0 0.0
        %765 = vmatpush2.msra.mxu0 0.0
        %766 = vmatprep.subr.mxu0 0.0
        %767 = vmatpush2.msra.mxu0 0.0
        %768 = vmatprep.subr.mxu0 0.0
        %769 = vmatpush2.msra.mxu0 0.0
        %770 = vmatprep.subr.mxu0 0.0
        %771 = vmatpush2.msra.mxu0 0.0
        %772 = vmatprep.subr.mxu0 0.0
        %773 = vmatpush2.msra.mxu0 0.0
        %774 = vmatprep.subr.mxu0 0.0
        %775 = vmatpush2.msra.mxu0 0.0
        %776 = vmatprep.subr.mxu0 0.0
        %777 = vmatpush2.msra.mxu0 0.0
        %778 = vmatprep.subr.mxu0 0.0
        %779 = vmatpush2.msra.mxu0 0.0
        %780 = vmatprep.subr.mxu0 0.0
        %781 = vmatpush2.msra.mxu0 0.0
        %782 = vmatprep.subr.mxu0 0.0
        %783 = vmatpush2.msra.mxu0 0.0
        %784 = vmatprep.subr.mxu0 0.0
        %785 = vmatpush2.msra.mxu0 0.0
        %786 = vmatprep.subr.mxu0 0.0
        %787 = vmatpush2.msra.mxu0 0.0
        %788 = vmatprep.subr.mxu0 0.0
        %789 = vmatpush2.msra.mxu0 0.0
        %790 = vmatprep.mubr.f32.mxu0 0.0
        %791 = vmatmul.mubr.f32.gmra.mxu0 %v452
        %v792 = vpop.f32.mrf.mxu0
        %v793 = vadd.f32 0.0, %v792
        %v794 = vpop.f32.mrf.mxu0
        %795 = vmatprep.mubr.f32.mxu0 0.0
        %796 = vmatmul.mubr.f32.gmra.mxu0 %v453
        %v797 = vpop.f32.mrf.mxu0
        %v798 = vadd.f32 0.0, %v797
        %v799 = vpop.f32.mrf.mxu0
        %800 = vmatprep.mubr.f32.mxu0 0.0
        %801 = vmatmul.mubr.f32.gmra.mxu0 %v454
        %v802 = vpop.f32.mrf.mxu0
        %v803 = vadd.f32 0.0, %v802
        %v804 = vpop.f32.mrf.mxu0
        %805 = vmatprep.mubr.f32.mxu0 0.0
        %806 = vmatmul.mubr.f32.gmra.mxu0 %v455
        %v807 = vpop.f32.mrf.mxu0
        %v808 = vadd.f32 0.0, %v807
        %v809 = vpop.f32.mrf.mxu0
        %810 = vmatprep.mubr.f32.mxu0 0.0
        %811 = vmatmul.mubr.f32.gmra.mxu0 %v456
        %v812 = vpop.f32.mrf.mxu0
        %v813 = vadd.f32 0.0, %v812
        %v814 = vpop.f32.mrf.mxu0
        %815 = vmatprep.mubr.f32.mxu0 0.0
        %816 = vmatmul.mubr.f32.gmra.mxu0 %v457
        %v817 = vpop.f32.mrf.mxu0
        %v818 = vadd.f32 0.0, %v817
        %v819 = vpop.f32.mrf.mxu0
        %820 = vmatprep.mubr.f32.mxu0 0.0
        %821 = vmatmul.mubr.f32.gmra.mxu0 %v458
        %v822 = vpop.f32.mrf.mxu0
        %v823 = vadd.f32 0.0, %v822
        %v824 = vpop.f32.mrf.mxu0
        %825 = vmatprep.mubr.f32.mxu0 0.0
        %826 = vmatmul.mubr.f32.gmra.mxu0 %v459
        %v827 = vpop.f32.mrf.mxu0
        %v828 = vadd.f32 0.0, %v827
        %v829 = vpop.f32.mrf.mxu0
        %830 = vdwg.mxu0
        %v831 = vld [vmem:[#allocation13] sm:$0xff]
        %v832 = vld [vmem:[#allocation13 + $0x8] sm:$0xff]
        %v833 = vld [vmem:[#allocation13 + $0x10] sm:$0xff]
        %v834 = vld [vmem:[#allocation13 + $0x18] sm:$0xff]
        %v835 = vld [vmem:[#allocation13 + $0x20] sm:$0xff]
        %v836 = vld [vmem:[#allocation13 + $0x28] sm:$0xff]
        %v837 = vld [vmem:[#allocation13 + $0x30] sm:$0xff]
        %v838 = vld [vmem:[#allocation13 + $0x38] sm:$0xff]
        %v839 = vld [vmem:[#allocation13 + $0x40] sm:$0xff]
        %v840 = vld [vmem:[#allocation13 + $0x48] sm:$0xff]
        %v841 = vld [vmem:[#allocation13 + $0x50] sm:$0xff]
        %v842 = vld [vmem:[#allocation13 + $0x58] sm:$0xff]
        %v843 = vld [vmem:[#allocation13 + $0x60] sm:$0xff]
        %v844 = vld [vmem:[#allocation13 + $0x68] sm:$0xff]
        %v845 = vld [vmem:[#allocation13 + $0x70] sm:$0xff]
        %v846 = vld [vmem:[#allocation13 + $0x78] sm:$0xff]
        %847 = vmatprep.subr.mxu0 0.0
        %848 = vmatpush1.msra.mxu0 %v846
        %849 = vmatprep.subr.mxu0 0.0
        %850 = vmatpush1.msra.mxu0 %v845
        %851 = vmatprep.subr.mxu0 0.0
        %852 = vmatpush1.msra.mxu0 %v844
        %853 = vmatprep.subr.mxu0 0.0
        %854 = vmatpush1.msra.mxu0 %v843
        %855 = vmatprep.subr.mxu0 0.0
        %856 = vmatpush1.msra.mxu0 %v842
        %857 = vmatprep.subr.mxu0 0.0
        %858 = vmatpush1.msra.mxu0 %v841
        %859 = vmatprep.subr.mxu0 0.0
        %860 = vmatpush1.msra.mxu0 %v840
        %861 = vmatprep.subr.mxu0 0.0
        %862 = vmatpush1.msra.mxu0 %v839
        %863 = vmatprep.subr.mxu0 0.0
        %864 = vmatpush1.msra.mxu0 %v838
        %865 = vmatprep.subr.mxu0 0.0
        %866 = vmatpush1.msra.mxu0 %v837
        %867 = vmatprep.subr.mxu0 0.0
        %868 = vmatpush1.msra.mxu0 %v836
        %869 = vmatprep.subr.mxu0 0.0
        %870 = vmatpush1.msra.mxu0 %v835
        %871 = vmatprep.subr.mxu0 0.0
        %872 = vmatpush1.msra.mxu0 %v834
        %873 = vmatprep.subr.mxu0 0.0
        %874 = vmatpush1.msra.mxu0 %v833
        %875 = vmatprep.subr.mxu0 0.0
        %876 = vmatpush1.msra.mxu0 %v832
        %877 = vmatprep.subr.mxu0 0.0
        %878 = vmatpush1.msra.mxu0 %v831
        %879 = vmatprep.subr.mxu0 0.0
        %880 = vmatpush2.msra.mxu0 0.0
        %881 = vmatprep.subr.mxu0 0.0
        %882 = vmatpush2.msra.mxu0 0.0
        %883 = vmatprep.subr.mxu0 0.0
        %884 = vmatpush2.msra.mxu0 0.0
        %885 = vmatprep.subr.mxu0 0.0
        %886 = vmatpush2.msra.mxu0 0.0
        %887 = vmatprep.subr.mxu0 0.0
        %888 = vmatpush2.msra.mxu0 0.0
        %889 = vmatprep.subr.mxu0 0.0
        %890 = vmatpush2.msra.mxu0 0.0
        %891 = vmatprep.subr.mxu0 0.0
        %892 = vmatpush2.msra.mxu0 0.0
        %893 = vmatprep.subr.mxu0 0.0
        %894 = vmatpush2.msra.mxu0 0.0
        %895 = vmatprep.subr.mxu0 0.0
        %896 = vmatpush2.msra.mxu0 0.0
        %897 = vmatprep.subr.mxu0 0.0
        %898 = vmatpush2.msra.mxu0 0.0
        %899 = vmatprep.subr.mxu0 0.0
        %900 = vmatpush2.msra.mxu0 0.0
        %901 = vmatprep.subr.mxu0 0.0
        %902 = vmatpush2.msra.mxu0 0.0
        %903 = vmatprep.subr.mxu0 0.0
        %904 = vmatpush2.msra.mxu0 0.0
        %905 = vmatprep.subr.mxu0 0.0
        %906 = vmatpush2.msra.mxu0 0.0
        %907 = vmatprep.subr.mxu0 0.0
        %908 = vmatpush2.msra.mxu0 0.0
        %909 = vmatprep.subr.mxu0 0.0
        %910 = vmatpush2.msra.mxu0 0.0
        %911 = vmatprep.mubr.f32.mxu0 0.0
        %912 = vmatmul.mubr.f32.gmra.mxu0 %v460
        %v913 = vpop.f32.mrf.mxu0
        %v914 = vadd.f32 0.0, %v913
        %v915 = vpop.f32.mrf.mxu0
        %916 = vmatprep.mubr.f32.mxu0 0.0
        %917 = vmatmul.mubr.f32.gmra.mxu0 %v461
        %v918 = vpop.f32.mrf.mxu0
        %v919 = vadd.f32 0.0, %v918
        %v920 = vpop.f32.mrf.mxu0
        %921 = vmatprep.mubr.f32.mxu0 0.0
        %922 = vmatmul.mubr.f32.gmra.mxu0 %v462
        %v923 = vpop.f32.mrf.mxu0
        %v924 = vadd.f32 0.0, %v923
        %v925 = vpop.f32.mrf.mxu0
        %926 = vmatprep.mubr.f32.mxu0 0.0
        %927 = vmatmul.mubr.f32.gmra.mxu0 %v463
        %v928 = vpop.f32.mrf.mxu0
        %v929 = vadd.f32 0.0, %v928
        %v930 = vpop.f32.mrf.mxu0
        %931 = vmatprep.mubr.f32.mxu0 0.0
        %932 = vmatmul.mubr.f32.gmra.mxu0 %v464
        %v933 = vpop.f32.mrf.mxu0
        %v934 = vadd.f32 0.0, %v933
        %v935 = vpop.f32.mrf.mxu0
        %936 = vmatprep.mubr.f32.mxu0 0.0
        %937 = vmatmul.mubr.f32.gmra.mxu0 %v465
        %v938 = vpop.f32.mrf.mxu0
        %v939 = vadd.f32 0.0, %v938
        %v940 = vpop.f32.mrf.mxu0
        %941 = vmatprep.mubr.f32.mxu0 0.0
        %942 = vmatmul.mubr.f32.gmra.mxu0 %v466
        %v943 = vpop.f32.mrf.mxu0
        %v944 = vadd.f32 0.0, %v943
        %v945 = vpop.f32.mrf.mxu0
        %946 = vmatprep.mubr.f32.mxu0 0.0
        %947 = vmatmul.mubr.f32.gmra.mxu0 %v467
        %v948 = vpop.f32.mrf.mxu0
        %v949 = vadd.f32 0.0, %v948
        %v950 = vpop.f32.mrf.mxu0
        %951 = vdwg.mxu0
        %v952 = vstv %s449
        %v953 = vmul.f32 %v952, %v452
        %v954 = vmul.f32 %v952, %v453
        %v955 = vmul.f32 %v952, %v454
        %v956 = vmul.f32 %v952, %v455
        %v957 = vmul.f32 %v952, %v456
        %v958 = vmul.f32 %v952, %v457
        %v959 = vmul.f32 %v952, %v458
        %v960 = vmul.f32 %v952, %v459
        %v961 = vstv %s450
        %v962 = vmul.f32 %v961, %v551
        %v963 = vmul.f32 %v961, %v556
        %v964 = vmul.f32 %v961, %v561
        %v965 = vmul.f32 %v961, %v566
        %v966 = vmul.f32 %v961, %v571
        %v967 = vmul.f32 %v961, %v576
        %v968 = vmul.f32 %v961, %v581
        %v969 = vmul.f32 %v961, %v586
        %v970 = vadd.f32 %v953, %v962
        %v971 = vadd.f32 %v954, %v963
        %v972 = vadd.f32 %v955, %v964
        %v973 = vadd.f32 %v956, %v965
        %v974 = vadd.f32 %v957, %v966
        %v975 = vadd.f32 %v958, %v967
        %v976 = vadd.f32 %v959, %v968
        %v977 = vadd.f32 %v960, %v969
        %v978 = vstv %s451
        %v979 = vmul.f32 %v978, %v793
        %v980 = vmul.f32 %v978, %v798
        %v981 = vmul.f32 %v978, %v803
        %v982 = vmul.f32 %v978, %v808
        %v983 = vmul.f32 %v978, %v813
        %v984 = vmul.f32 %v978, %v818
        %v985 = vmul.f32 %v978, %v823
        %v986 = vmul.f32 %v978, %v828
        %v987 = vadd.f32 %v970, %v979
        %v988 = vadd.f32 %v971, %v980
        %v989 = vadd.f32 %v972, %v981
        %v990 = vadd.f32 %v973, %v982
        %v991 = vadd.f32 %v974, %v983
        %v992 = vadd.f32 %v975, %v984
        %v993 = vadd.f32 %v976, %v985
        %v994 = vadd.f32 %v977, %v986
        %v995 = vmul.f32 %v952, %v460
        %v996 = vmul.f32 %v952, %v461
        %v997 = vmul.f32 %v952, %v462
        %v998 = vmul.f32 %v952, %v463
        %v999 = vmul.f32 %v952, %v464
        %v1000 = vmul.f32 %v952, %v465
        %v1001 = vmul.f32 %v952, %v466
        %v1002 = vmul.f32 %v952, %v467
        %v1003 = vmul.f32 %v961, %v672
        %v1004 = vmul.f32 %v961, %v677
        %v1005 = vmul.f32 %v961, %v682
        %v1006 = vmul.f32 %v961, %v687
        %v1007 = vmul.f32 %v961, %v692
        %v1008 = vmul.f32 %v961, %v697
        %v1009 = vmul.f32 %v961, %v702
        %v1010 = vmul.f32 %v961, %v707
        %v1011 = vadd.f32 %v995, %v1003
        %v1012 = vadd.f32 %v996, %v1004
        %v1013 = vadd.f32 %v997, %v1005
        %v1014 = vadd.f32 %v998, %v1006
        %v1015 = vadd.f32 %v999, %v1007
        %v1016 = vadd.f32 %v1000, %v1008
        %v1017 = vadd.f32 %v1001, %v1009
        %v1018 = vadd.f32 %v1002, %v1010
        %v1019 = vmul.f32 %v978, %v914
        %v1020 = vmul.f32 %v978, %v919
        %v1021 = vmul.f32 %v978, %v924
        %v1022 = vmul.f32 %v978, %v929
        %v1023 = vmul.f32 %v978, %v934
        %v1024 = vmul.f32 %v978, %v939
        %v1025 = vmul.f32 %v978, %v944
        %v1026 = vmul.f32 %v978, %v949
        %v1027 = vadd.f32 %v1011, %v1019
        %v1028 = vadd.f32 %v1012, %v1020
        %v1029 = vadd.f32 %v1013, %v1021
        %v1030 = vadd.f32 %v1014, %v1022
        %v1031 = vadd.f32 %v1015, %v1023
        %v1032 = vadd.f32 %v1016, %v1024
        %v1033 = vadd.f32 %v1017, %v1025
        %v1034 = vadd.f32 %v1018, %v1026
        %1035 = vst [vmem:[%s437] sm:$0xff] %v987
        %1036 = vst [vmem:[%s437 + $0x8] sm:$0xff] %v988
        %1037 = vst [vmem:[%s437 + $0x10] sm:$0xff] %v989
        %1038 = vst [vmem:[%s437 + $0x18] sm:$0xff] %v990
        %1039 = vst [vmem:[%s437 + $0x20] sm:$0xff] %v991
        %1040 = vst [vmem:[%s437 + $0x28] sm:$0xff] %v992
        %1041 = vst [vmem:[%s437 + $0x30] sm:$0xff] %v993
        %1042 = vst [vmem:[%s437 + $0x38] sm:$0xff] %v994
        %1043 = vst [vmem:[%s444] sm:$0xff] %v1027
        %1044 = vst [vmem:[%s444 + $0x8] sm:$0xff] %v1028
        %1045 = vst [vmem:[%s444 + $0x10] sm:$0xff] %v1029
        %1046 = vst [vmem:[%s444 + $0x18] sm:$0xff] %v1030
        %1047 = vst [vmem:[%s444 + $0x20] sm:$0xff] %v1031
        %1048 = vst [vmem:[%s444 + $0x28] sm:$0xff] %v1032
        %1049 = vst [vmem:[%s444 + $0x30] sm:$0xff] %v1033
        %1050 = vst [vmem:[%s444 + $0x38] sm:$0xff] %v1034
        %s1051 = sand.u32 %s200, 1
        %s1052 = scalar_lea.sflag [#allocation4], %s1051
        %s1053 = sand.u32 %s200, 1
        %s1054 = smul.addr %s1053, 64
        %s1055 = scalar_lea.vmem [#allocation15], %s1054
        %s1056 = sand.u32 %s226, 1
        %s1057 = scalar_lea.sflag [#allocation17], %s1056
        %s1058 = sand.u32 %s226, 1
        %s1059 = smul.addr %s1058, 64
        %s1060 = scalar_lea.vmem [#allocation16], %s1059
        // Predicated region
        $region77: #{tpu_custom_call.1} parent=47 // pred_check
          %p1061 = pneg %p210
        $region78: #{tpu_custom_call.1} parent=47 // pred_check_branch
          %1063 = sbr.rel (%p1061) target = $region80
        $region79: #{tpu_custom_call.1} parent=47 // pred_region
          %s1064 = smul.u32 8, %s35
          %s1066 = ssub.s32 1024, 1024
          %1067 = vsyncadd %s1052, %s1066
          %s1068 = smul.addr %s1064, 128
          %s1069 = scalar_lea.hbm %s7, %s1068
          %s1070 = sshll.u32 %s1055, 4
          %s1071 = int_to_ptr.vmem [resolvable:$true] %s1070
          %1076 = dma.vmem_to_hbm [thread:$0]  %s1071, 1024, %s1069, %s1052, 128, 128, 8
        $region80: #{tpu_custom_call.1} parent=47 // pred_fallthru
          _
        // Predicated region
        $region81: #{tpu_custom_call.1} parent=47 // pred_check
          %p1077 = pneg %p236
        $region82: #{tpu_custom_call.1} parent=47 // pred_check_branch
          %1079 = sbr.rel (%p1077) target = $region84
        $region83: #{tpu_custom_call.1} parent=47 // pred_region
          %s1080 = smul.u32 8, %s35
          %s1082 = ssub.s32 1024, 1024
          %1083 = vsyncadd %s1057, %s1082
          %s1084 = smul.addr %s1080, 128
          %s1085 = scalar_lea.hbm %s8, %s1084
          %s1086 = sshll.u32 %s1060, 4
          %s1087 = int_to_ptr.vmem [resolvable:$true] %s1086
          %1092 = dma.vmem_to_hbm [thread:$0]  %s1087, 1024, %s1085, %s1057, 128, 128, 8
        $region84: #{tpu_custom_call.1} parent=47 // pred_fallthru
          _
      $region48: #{tpu_custom_call.1} parent=5 // pred_fallthru
        _
      %p1093 = scmp.le.s32.totalorder 2, %s30
      // Predicated region
      $region85: #{tpu_custom_call.1} parent=5 // pred_check
        %p1094 = pneg %p1093
      $region86: #{tpu_custom_call.1} parent=5 // pred_check_branch
        %1096 = sbr.rel (%p1094) target = $region88
      $region87: #{tpu_custom_call.1} parent=5 // pred_region
        %s1097 = ssub.s32 %s30, 2
        // Predicated region
        $region89: #{tpu_custom_call.1} parent=87 // pred_check
          %p1098 = pneg %p216
        $region90: #{tpu_custom_call.1} parent=87 // pred_check_branch
          %1100 = sbr.rel (%p1098) target = $region92
        $region91: #{tpu_custom_call.1} parent=87 // pred_region
          %s1101 = sand.u32 %s201, 1
          %s1102 = scalar_lea.sflag [#allocation4], %s1101
          %s1103 = sand.u32 %s201, 1
          %s1104 = smul.addr %s1103, 64
          %s1105 = scalar_lea.vmem [#allocation15], %s1104
          %1106 = dma.done %s1102, 1024
        $region92: #{tpu_custom_call.1} parent=87 // pred_fallthru
          _
        // Predicated region
        $region93: #{tpu_custom_call.1} parent=87 // pred_check
          %p1107 = pneg %p242
        $region94: #{tpu_custom_call.1} parent=87 // pred_check_branch
          %1109 = sbr.rel (%p1107) target = $region96
        $region95: #{tpu_custom_call.1} parent=87 // pred_region
          %s1110 = sand.u32 %s227, 1
          %s1111 = scalar_lea.sflag [#allocation17], %s1110
          %s1112 = sand.u32 %s227, 1
          %s1113 = smul.addr %s1112, 64
          %s1114 = scalar_lea.vmem [#allocation16], %s1113
          %1115 = dma.done %s1111, 1024
        $region96: #{tpu_custom_call.1} parent=87 // pred_fallthru
          _
      $region88: #{tpu_custom_call.1} parent=5 // pred_fallthru
        _
    $region6: #{tpu_custom_call.1} parent=1 // loop_footer
      %s34 = sadd.s32 1, %s30
    $region7: #{tpu_custom_call.1} parent=1 // loop_footer_branch
      %29 = sbr.rel target = $region3
    $region8: #{tpu_custom_call.1} parent=1 // loop_exit
      _
    %1116 = vsyncpa [#allocation3], 1
    %s1117 = scalar_lea.sflag [#allocation3], 1
    %1118 = vsyncpa %s1117, 1
    %1119 = vsyncpa [#allocation8], 1
    %s1120 = scalar_lea.sflag [#allocation8], 1
    %1121 = vsyncpa %s1120, 1
    %1122 = vsyncpa [#allocation11], 1
    %1123 = vsyncpa [#allocation14], 1
    %1124 = vsyncpa [#allocation4], 1
    %s1125 = scalar_lea.sflag [#allocation4], 1
    %1126 = vsyncpa %s1125, 1
    %1127 = vsyncpa [#allocation17], 1
    %s1128 = scalar_lea.sflag [#allocation17], 1
    %1129 = vsyncpa %s1128, 1
    %1130 = vsyncpa [#allocation5], 1
    %s1131 = scalar_lea.sflag [#allocation5], 1
    %1132 = vsyncpa %s1131, 1

</llo_original>
